<compile_context>
chip_gen: v5e
topology: v5e:2x2
jax: 0.10.0
libtpu: 0.0.40
codegen_flags: <defaults>
</compile_context>

<pallas_src>
import math

import jax
import jax.numpy as jnp
from jax.experimental import pallas as pl
from jax.experimental.pallas import tpu as pltpu


_C0 = math.sqrt(2.0 / math.pi)           # sqrt(2/pi)
_C1 = _C0 * 0.044715                      # sqrt(2/pi) * 0.044715

# Preferred lane-dense widths (multiples of 128), largest first.
_LANE_CANDIDATES = (4096, 2048, 1024, 512, 256, 128)


def _tpu_generation_params():
    """Return (target_block_bytes, num_tensorcores, vmem_limit_bytes)."""
    try:
        kind = jax.devices()[0].device_kind.lower()
    except Exception:  # pragma: no cover - defensive
        kind = ""
    if "v7" in kind:
        # 2 TCs/chip, 64 MiB VMEM per TC: 8 MiB blocks -> 4x block = 32 MiB pipelined.
        target, n_tc = 8 * 1024 * 1024, 2
    elif "v6" in kind:
        # 1 TC, 128 MiB VMEM: plenty of headroom.
        target, n_tc = 8 * 1024 * 1024, 1
    else:
        # v5e / unknown: scoped-VMEM default is only 16 MiB, stay conservative
        # (the explicit vmem_limit_bytes below raises it anyway).
        target, n_tc = 4 * 1024 * 1024, 1
    # in + out, double buffered = 4x block, plus headroom for compiler scratch.
    vmem_limit = min(4 * target + (8 << 20), 48 << 20)
    return target, n_tc, vmem_limit


def _gelu_kernel(x_ref, o_ref):
    x = x_ref[...]
    if jnp.issubdtype(x.dtype, jnp.floating) and x.dtype.itemsize == 2:
        # 16-bit inputs: cheap pointwise ops stay packed in the native dtype
        # (2x per vreg on v6e/v7x); only the tanh goes through f32 for accuracy.
        x2 = x * x
        inner = (x * (_C0 + _C1 * x2)).astype(jnp.float32)
        t = jnp.tanh(inner).astype(x.dtype)
        o_ref[...] = (0.5 * x * (1.0 + t)).astype(o_ref.dtype)
    else:
        xf = x.astype(jnp.float32)
        inner = xf * (_C0 + _C1 * (xf * xf))
        o_ref[...] = (0.5 * xf * (1.0 + jnp.tanh(inner))).astype(o_ref.dtype)


def _gelu_jnp(x: jax.Array) -> jax.Array:
    """Plain-jnp fallback (tiny / unaligned tails). Same math as the kernel."""
    xf = x.astype(jnp.float32)
    inner = xf * (_C0 + _C1 * (xf * xf))
    return (0.5 * xf * (1.0 + jnp.tanh(inner))).astype(x.dtype)


def _gelu_2d(x2d: jax.Array, target_block_bytes: int, n_tc: int,
             vmem_limit: int) -> jax.Array:
    rows, lane = x2d.shape
    itemsize = x2d.dtype.itemsize
    n = rows * lane
    # Minimum sublane granularity: 8 for 32-bit, 16 for 16-bit, 32 for 8-bit.
    sub = 8 * max(1, 4 // itemsize)

    # Rows per block: aim for ~target_block_bytes, rounded to sublane granularity.
    row_tile = max(sub, (target_block_bytes // (lane * itemsize)) // sub * sub)
    row_tile = min(row_tile, rows)

    # Keep at least 2 grid steps per TensorCore when rows allow, so each core
    # gets load(i+1)/compute(i) overlap (the grid axis is "parallel").
    min_steps = 2 * n_tc
    if pl.cdiv(rows, row_tile) < min_steps and rows >= min_steps * sub:
        row_tile = pl.cdiv(pl.cdiv(rows, min_steps), sub) * sub

    grid = (pl.cdiv(rows, row_tile),)

    return pl.pallas_call(
        _gelu_kernel,
        out_shape=jax.ShapeDtypeStruct((rows, lane), x2d.dtype),
        grid_spec=pltpu.PrefetchScalarGridSpec(
            num_scalar_prefetch=0,
            grid=grid,
            in_specs=[pl.BlockSpec((row_tile, lane), lambda i: (i, 0))],
            out_specs=pl.BlockSpec((row_tile, lane), lambda i: (i, 0)),
        ),
        compiler_params=pltpu.CompilerParams(
            dimension_semantics=("parallel",),
            vmem_limit_bytes=vmem_limit,
        ),
        cost_estimate=pl.CostEstimate(
            flops=7 * n,
            transcendentals=n,
            bytes_accessed=2 * n * itemsize,
        ),
    )(x2d)


def gelu(x: jax.Array) -> jax.Array:
    """Tanh-approximation GELU, matching the PyTorch module exactly."""
    orig_shape = x.shape
    n = int(x.size)
    if n == 0:
        return x

    target_block_bytes, n_tc, vmem_limit = _tpu_generation_params()
    flat = x.reshape(-1)

    # Prefer a lane width (multiple of 128) that divides the element count
    # exactly -> whole array goes through Pallas with unmasked stores.
    lane = 0
    for cand in _LANE_CANDIDATES:
        if n % cand == 0:
            lane = cand
            break

    if lane:
        out_flat = _gelu_2d(
            flat.reshape(n // lane, lane), target_block_bytes, n_tc, vmem_limit
        ).reshape(-1)
        return out_flat.reshape(orig_shape)

    # Ragged element count: run Pallas on the 128-aligned prefix and handle
    # the short tail (< lane elements) with plain jnp -- avoids the full-array
    # pad + slice copies (which would roughly double HBM traffic).
    for cand in _LANE_CANDIDATES:
        if n >= cand:
            lane = cand
            break

    if lane == 0:
        # Fewer than 128 elements total: not worth a kernel launch.
        return _gelu_jnp(flat).reshape(orig_shape)

    aligned = (n // lane) * lane
    main_out = _gelu_2d(
        flat[:aligned].reshape(aligned // lane, lane),
        target_block_bytes, n_tc, vmem_limit,
    ).reshape(-1)
    tail_out = _gelu_jnp(flat[aligned:])
    out_flat = jnp.concatenate([main_out, tail_out])
    return out_flat.reshape(orig_shape)


def _gelu_reference(x: jax.Array) -> jax.Array:
    return 0.5 * x * (1.0 + jnp.tanh(_C0 * (x + 0.044715 * jnp.power(x, 3))))


if __name__ == "__main__":
    key = jax.random.PRNGKey(0)

    # 1) Module-spec shape: batch=2, seq=8, hidden=32 (f32) -- single-block path.
    x = jax.random.normal(key, (2, 8, 32), dtype=jnp.float32)
    y = gelu(x)
    jax.block_until_ready(y)
    y_ref = _gelu_reference(x)
    assert y.shape == x.shape and y.dtype == x.dtype
    assert jnp.allclose(y, y_ref, atol=1e-6, rtol=1e-5), "mismatch vs reference (small)"

    # 2) Larger shape exercising the multi-block (>= 2 grid steps) path.
    x2 = jax.random.normal(jax.random.PRNGKey(1), (4, 128, 1024), dtype=jnp.float32)
    y2 = gelu(x2)
    jax.block_until_ready(y2)
    assert jnp.allclose(y2, _gelu_reference(x2), atol=1e-6, rtol=1e-5), "mismatch (tiled)"

    # 3) Non-128-multiple element count exercising the aligned-prefix + tail path.
    x3 = jax.random.normal(jax.random.PRNGKey(2), (2, 8, 33), dtype=jnp.float32)
    y3 = gelu(x3)
    jax.block_until_ready(y3)
    assert jnp.allclose(y3, _gelu_reference(x3), atol=1e-6, rtol=1e-5), "mismatch (ragged)"

    # 4) bf16 input exercising the packed 16-bit math path (tanh kept in f32).
    x4 = jax.random.normal(jax.random.PRNGKey(3), (2, 64, 256), dtype=jnp.bfloat16)
    y4 = gelu(x4)
    jax.block_until_ready(y4)
    assert jnp.allclose(
        y4.astype(jnp.float32),
        _gelu_reference(x4.astype(jnp.float32)),
        atol=2e-2, rtol=2e-2,
    ), "mismatch (bf16)"

    print("KERNEL_OK")
</pallas_src>

<mosaic_0001>
module attributes {stable_mosaic.version = 11 : i64} {
  func.func @_gelu_kernel(%arg0: i32, %arg1: memref<1x512xf32, #tpu.memory_space<vmem>>, %arg2: memref<1x512xf32, #tpu.memory_space<vmem>>) attributes {dimension_semantics = [#tpu.dimension_semantics<parallel>], iteration_bounds = array<i64: 1>, scalar_prefetch = 0 : i64, scratch_operands = 0 : i64, tpu.core_type = #tpu.core_type<tc>, window_params = [{transform_indices = @transform_0, window_bounds = array<i64: 1, 512>}, {transform_indices = @transform_1, window_bounds = array<i64: 1, 512>}]} {
    %c0 = arith.constant 0 : index
    %c0_0 = arith.constant 0 : index
    %0 = vector.load %arg1[%c0, %c0_0] : memref<1x512xf32, #tpu.memory_space<vmem>>, vector<1x512xf32>
    %1 = arith.mulf %0, %0 : vector<1x512xf32>
    %cst = arith.constant 0.0356774069 : f32
    %2 = vector.broadcast %cst : f32 to vector<1x512xf32>
    %3 = arith.mulf %2, %1 : vector<1x512xf32>
    %cst_1 = arith.constant 0.797884583 : f32
    %4 = vector.broadcast %cst_1 : f32 to vector<1x512xf32>
    %5 = arith.addf %4, %3 : vector<1x512xf32>
    %6 = arith.mulf %0, %5 : vector<1x512xf32>
    %cst_2 = arith.constant 5.000000e-01 : f32
    %7 = vector.broadcast %cst_2 : f32 to vector<1x512xf32>
    %8 = arith.mulf %7, %0 : vector<1x512xf32>
    %9 = math.tanh %6 : vector<1x512xf32>
    %cst_3 = arith.constant 1.000000e+00 : f32
    %10 = vector.broadcast %cst_3 : f32 to vector<1x512xf32>
    %11 = arith.addf %10, %9 : vector<1x512xf32>
    %12 = arith.mulf %8, %11 : vector<1x512xf32>
    %c0_4 = arith.constant 0 : index
    %c0_5 = arith.constant 0 : index
    %13 = vector.load %arg2[%c0_4, %c0_5] : memref<1x512xf32, #tpu.memory_space<vmem>>, vector<1x512xf32>
    tpu.vector_store %arg2[%c0_4, %c0_5], %12 {strides = array<i32>} : memref<1x512xf32, #tpu.memory_space<vmem>>, vector<1x512xf32>,
    return
  }
  func.func @transform_0(%arg0: i32) -> (i32, i32) {
    %c0_i32 = arith.constant 0 : i32
    %c0_i32_0 = arith.constant 0 : i32
    return %arg0, %c0_i32 : i32, i32
  }
  func.func @transform_1(%arg0: i32) -> (i32, i32) {
    %c0_i32 = arith.constant 0 : i32
    %c0_i32_0 = arith.constant 0 : i32
    return %arg0, %c0_i32 : i32, i32
  }
}

</mosaic_0001>

<llo_original>
// kernel: tpu_custom_call.1
$region0: #{tpu_custom_call.1}
  #allocation0 [shape = 'u32[]', space=smem, size = 0x4, offset = 0x4, fixed_abs, tag = 'smem constant byte address 0x4 - core index']
  #allocation1 [shape = 'u32[72,128]{1,0:T(1,128)}', space=vmem, size = 0x9000, scoped, tag = 'internal scratch']
  %s0 = inlined_call_operand.hbm [shape: f32[1,512], index: 0, kind: input, shape index: {}]
  %s1 = inlined_call_operand.hbm [shape: f32[1,512], index: 1, kind: output, shape index: {}]
  %s2 = sld [smem:[#allocation0]]
  $region18: #{tpu_custom_call.1} parent=0
    _
  %s4 = ssub.s32 1, %s2
  %s5 = scalar_select 0, %s4, %s2
  $region1: #{tpu_custom_call.1} parent=0
    #allocation2 [shape = 'u8[2048]{0}', space=vmem, size = 0x800, scoped, tag = 'input window, operand 0, single buffered']
    #allocation3 [shape = 's32[1]{0}', space=sflag, size = 0x4, scoped, tag = 'scoped memory for tpu_custom_call.1']
    #allocation4 [shape = 's32[1]{0}', space=sflag, size = 0x4, scoped, tag = 'scoped memory for tpu_custom_call.1']
    #allocation5 [shape = 'u8[2048]{0}', space=vmem, size = 0x800, scoped, tag = 'output window, operand 0, single buffered']
    %6 = vsyncpa [#allocation3], 0
    %7 = vsyncpa [#allocation4], 0
    // Predicated region
    $region2: #{tpu_custom_call.1} parent=1 // pred_check
      _
    $region3: #{tpu_custom_call.1} parent=1 // pred_check_branch
      %9 = sbr.rel (0) target = $region5
    $region4: #{tpu_custom_call.1} parent=1 // pred_region
      %11 = vsyncadd [#allocation3], 0
      %s13 = sshll.u32 %s0, 4
      %s14 = int_to_ptr.hbm [resolvable:$true] %s13
      %s15 = sshll.u32 [#allocation2], 4
      %s16 = int_to_ptr.vmem [resolvable:$true] %s15
      %18 = dma.hbm_to_vmem [thread:$0]  %s14, 64, %s16, [#allocation3]
    $region5: #{tpu_custom_call.1} parent=1 // pred_fallthru
      _
    // Predicated region
    $region6: #{tpu_custom_call.1} parent=1 // pred_check
      _
    $region7: #{tpu_custom_call.1} parent=1 // pred_check_branch
      %20 = sbr.rel (0) target = $region9
    $region8: #{tpu_custom_call.1} parent=1 // pred_region
      %22 = dma.done [#allocation3], 64
    $region9: #{tpu_custom_call.1} parent=1 // pred_fallthru
      _
    %v23 = vld [vmem:[#allocation2] sm:$0xf]
    %v24 = vmul.f32 %v23, %v23
    %v25 = vmul.f32 %v24, 0.035677407
    %v26 = vadd.f32 %v25, 0.7978846
    %v27 = vmul.f32 %v23, %v26
    %v28 = vmul.f32 %v23, 0.5
    %v29 = vtanh.pop %v27
    %v30 = vadd.f32 %v29, 1.0
    %v31 = vmul.f32 %v28, %v30
    %v32 = vlaneseq
    %vm33 = vcmp.ge.s32.totalorder %v32, 0
    %vm34 = vcmp.lt.s32.totalorder %v32, 512
    %vm35 = vmand %vm33, %vm34
    %36 = vst.msk [vmem:[#allocation5] sm:$0xf] %vm35, %v31
    // Predicated region
    $region10: #{tpu_custom_call.1} parent=1 // pred_check
      _
    $region11: #{tpu_custom_call.1} parent=1 // pred_check_branch
      %38 = sbr.rel (0) target = $region13
    $region12: #{tpu_custom_call.1} parent=1 // pred_region
      %40 = vsyncadd [#allocation4], 0
      %s42 = sshll.u32 [#allocation5], 4
      %s43 = int_to_ptr.vmem [resolvable:$true] %s42
      %s44 = sshll.u32 %s1, 4
      %s45 = int_to_ptr.hbm [resolvable:$true] %s44
      %47 = dma.vmem_to_hbm [thread:$0]  %s43, 64, %s45, [#allocation4]
    $region13: #{tpu_custom_call.1} parent=1 // pred_fallthru
      _
    // Predicated region
    $region14: #{tpu_custom_call.1} parent=1 // pred_check
      _
    $region15: #{tpu_custom_call.1} parent=1 // pred_check_branch
      %49 = sbr.rel (0) target = $region17
    $region16: #{tpu_custom_call.1} parent=1 // pred_region
      %51 = dma.done [#allocation4], 64
    $region17: #{tpu_custom_call.1} parent=1 // pred_fallthru
      _
    %52 = vsyncpa [#allocation3], 1
    %53 = vsyncpa [#allocation4], 1

</llo_original>
